<compile_context>
chip_gen: v7x
topology: tpu7x:2x2x1
jax: 0.10.0
libtpu: 0.0.40
codegen_flags: <defaults>
</compile_context>

<pallas_src>
import functools

import jax
import jax.numpy as jnp
from jax.experimental import pallas as pl
from jax.experimental.pallas import tpu as pltpu


def _pos_embed_kernel(ids_ref, wexp_ref, out_ref, *, tag_len, pack, rate,
                      training, seed):
    tile_r = ids_ref.shape[0]            # packed rows in this tile
    k_dim = pack * tag_len               # one-hot / contraction width

    ids = ids_ref[...]                   # (tile_r, pack) int32

    # Build the packed one-hot: column c of row r is 1 iff
    # c == ids[r, c // tag_len] + (c // tag_len) * tag_len.
    cols = jax.lax.broadcasted_iota(jnp.int32, (tile_r, k_dim), 1)
    pieces = []
    for p in range(pack):                                # static, small
        idp = ids[:, p:p + 1]                            # (tile_r, 1)
        valid = (idp >= 0) & (idp < tag_len)
        gid = jnp.where(valid, idp + p * tag_len, -1)    # invalid -> no match
        pieces.append(jnp.broadcast_to(gid, (tile_r, tag_len)))
    gid_rep = pieces[0] if pack == 1 else jnp.concatenate(pieces, axis=1)
    onehot = (cols == gid_rep).astype(jnp.float32)       # (tile_r, k_dim)

    # Gather via MXU matmul against the block-diagonal expanded table:
    # result row r = [table[ids[r,0]], table[ids[r,1]], ...] concatenated
    # along the lane axis -> lane-dense (tile_r, pack*tag_dim).
    emb = jnp.dot(onehot, wexp_ref[...],
                  preferred_element_type=jnp.float32)

    if training and rate > 0.0:
        # Portable hash-based inverted dropout, generated at the packed
        # lane-dense shape. Global row index (via program_id) makes every
        # tile draw an independent mask.
        tile = pl.program_id(0)
        grow = (jax.lax.broadcasted_iota(jnp.int32, emb.shape, 0)
                + tile * tile_r).astype(jnp.uint32)
        gcol = jax.lax.broadcasted_iota(jnp.int32, emb.shape, 1).astype(jnp.uint32)
        h = (grow * jnp.uint32(0x9E3779B1)
             + gcol * jnp.uint32(0x85EBCA77)
             + jnp.uint32(seed & 0xFFFFFFFF))
        h = h ^ (h >> 16)
        h = h * jnp.uint32(0x7FEB352D)
        h = h ^ (h >> 15)
        h = h * jnp.uint32(0x846CA68B)
        h = h ^ (h >> 16)
        thresh = jnp.uint32(min(int(rate * (2 ** 32)), 2 ** 32 - 1))
        keep = h >= thresh
        scale = jnp.float32(1.0 / (1.0 - rate))
        emb = jnp.where(keep, emb * scale, jnp.float32(0.0))

    out_ref[...] = emb.astype(out_ref.dtype)


def pos_embeddings_forward(pos_seq, table, *, drop_out_rate=0.1,
                           training=False, seed=0):
    """Pallas equivalent of POSEmbeddings.forward.

    pos_seq: (B, S) int32 tag ids.
    table:   (tag_len, tag_dim) float32 embedding weights (row 0 = padding = 0).
    Returns: (B, S, tag_dim) float32.
    """
    B, S = pos_seq.shape
    tag_len, tag_dim = table.shape
    n = B * S

    # Lane-dense packing: put `pack` tokens side by side so the output row is
    # a multiple of 128 lanes (pack=4 for tag_dim=32).
    if tag_dim <= 128 and 128 % tag_dim == 0:
        pack = 128 // tag_dim
    else:
        pack = 1
    lane = pack * tag_dim

    r = -(-n // pack)                          # packed rows needed
    tile_r = min(512, ((r + 7) // 8) * 8)      # (8,128)-aligned, VMEM-safe on
                                               # v7x (64 MiB) as well as v5e/v6e
    r_pad = ((r + tile_r - 1) // tile_r) * tile_r
    n_pad = r_pad * pack

    ids_flat = jnp.zeros((n_pad,), jnp.int32).at[:n].set(
        pos_seq.reshape(-1).astype(jnp.int32))      # pad with padding_idx=0
    ids = ids_flat.reshape(r_pad, pack)

    # Block-diagonal expanded table so the packed gather is one MXU matmul.
    if pack > 1:
        wexp = jnp.kron(jnp.eye(pack, dtype=table.dtype), table)
    else:
        wexp = table                                   # (tag_len, tag_dim)
    k_dim = pack * tag_len

    kernel = functools.partial(
        _pos_embed_kernel, tag_len=tag_len, pack=pack,
        rate=float(drop_out_rate), training=bool(training), seed=int(seed))

    grid = (r_pad // tile_r,)
    bytes_accessed = (r_pad * pack * 4            # ids
                      + k_dim * lane * 4          # table
                      + r_pad * lane * 4)         # output
    cost = pl.CostEstimate(flops=2 * r_pad * k_dim * lane,
                           transcendentals=0,
                           bytes_accessed=bytes_accessed)

    out = pl.pallas_call(
        kernel,
        out_shape=jax.ShapeDtypeStruct((r_pad, lane), jnp.float32),
        grid=grid,
        in_specs=[
            pl.BlockSpec((tile_r, pack), lambda i: (i, 0)),   # ids tile
            pl.BlockSpec((k_dim, lane), lambda i: (0, 0)),    # full table, resident
        ],
        out_specs=pl.BlockSpec((tile_r, lane), lambda i: (i, 0)),
        compiler_params=pltpu.CompilerParams(
            dimension_semantics=("parallel",)),
        cost_estimate=cost,
    )(ids, wexp)

    return out.reshape(n_pad, tag_dim)[:n].reshape(B, S, tag_dim)


def init_pos_embedding_table(key, tag_len, tag_dim):
    # nn.Embedding init: N(0, 1); padding_idx row forced to zero.
    w = jax.random.normal(key, (tag_len, tag_dim), dtype=jnp.float32)
    w = w.at[0].set(0.0)
    return w


if __name__ == "__main__":
    key = jax.random.PRNGKey(0)
    k_tab, k_ids = jax.random.split(key)

    # Small shapes consistent with the module: tag vocab 32, tag_dim 32,
    # batch=2, seq=8.
    tag_len, tag_dim = 32, 32
    B, S = 2, 8
    drop_out_rate = 0.1

    table = init_pos_embedding_table(k_tab, tag_len, tag_dim)
    pos_seq = jax.random.randint(k_ids, (B, S), minval=0, maxval=tag_len,
                                 dtype=jnp.int32)

    # Eval-mode forward (dropout is identity), as in module.eval().
    out = pos_embeddings_forward(pos_seq, table,
                                 drop_out_rate=drop_out_rate,
                                 training=False)
    jax.block_until_ready(out)

    # Sanity checks against pure-JAX reference embedding lookup.
    ref = table[pos_seq]
    assert out.shape == (B, S, tag_dim)
    assert jnp.allclose(out, ref, atol=1e-5), "mismatch vs reference gather"
    # padding_idx=0 rows must be zero.
    pad_mask = (pos_seq == 0)
    assert bool(jnp.all(jnp.where(pad_mask[..., None], out, 0.0) == 0.0))

    # Train-mode dropout path: every element must be either dropped (0) or the
    # reference value scaled by 1/(1-rate).
    out_train = pos_embeddings_forward(pos_seq, table,
                                       drop_out_rate=drop_out_rate,
                                       training=True, seed=42)
    jax.block_until_ready(out_train)
    assert out_train.shape == (B, S, tag_dim)
    scaled = ref * jnp.float32(1.0 / (1.0 - drop_out_rate))
    kept = jnp.isclose(out_train, scaled, atol=1e-4)
    dropped = jnp.abs(out_train) <= 1e-7
    assert bool(jnp.all(kept | dropped)), "dropout output not {0, ref/(1-p)}"

    # TODO(synk): if the embedding table is trained, gradient masking for
    # padding_idx=0 must be done outside this forward kernel (PyTorch masks it
    # inside nn.Embedding's backward).
    print("KERNEL_OK")
</pallas_src>

<mosaic_0001>
module attributes {stable_mosaic.version = 11 : i64} {
  func.func @_pos_embed_kernel(%arg0: i32, %arg1: memref<8x4xi32, #tpu.memory_space<vmem>>, %arg2: memref<128x128xf32, #tpu.memory_space<vmem>>, %arg3: memref<8x128xf32, #tpu.memory_space<vmem>>) attributes {dimension_semantics = [#tpu.dimension_semantics<parallel>], iteration_bounds = array<i64: 1>, scalar_prefetch = 0 : i64, scratch_operands = 0 : i64, tpu.core_type = #tpu.core_type<tc>, window_params = [{transform_indices = @transform_0, window_bounds = array<i64: 8, 4>}, {pipeline_mode = #tpu.pipeline_mode<synchronous>, transform_indices = @transform_1, window_bounds = array<i64: 128, 128>}, {transform_indices = @transform_2, window_bounds = array<i64: 8, 128>}]} {
    %c0 = arith.constant 0 : index
    %c0_0 = arith.constant 0 : index
    %0 = vector.load %arg1[%c0, %c0_0] : memref<8x4xi32, #tpu.memory_space<vmem>>, vector<8x4xi32>
    %1 = tpu.iota {dimensions = array<i32: 1>} : vector<8x128xi32>
    %2 = vector.extract_strided_slice %0 {offsets = [0, 0], sizes = [8, 1], strides = [1, 1]} : vector<8x4xi32> to vector<8x1xi32>
    %c0_i32 = arith.constant 0 : i32
    %3 = vector.broadcast %c0_i32 : i32 to vector<8x1xi32>
    %4 = arith.cmpi sge, %2, %3 : vector<8x1xi32>
    %c32_i32 = arith.constant 32 : i32
    %5 = vector.broadcast %c32_i32 : i32 to vector<8x1xi32>
    %6 = arith.cmpi slt, %2, %5 : vector<8x1xi32>
    %7 = arith.andi %4, %6 : vector<8x1xi1>
    %c0_i32_1 = arith.constant 0 : i32
    %8 = vector.broadcast %c0_i32_1 : i32 to vector<8x1xi32>
    %9 = arith.addi %2, %8 : vector<8x1xi32>
    %c-1_i32 = arith.constant -1 : i32
    %10 = vector.broadcast %c-1_i32 : i32 to vector<8x1xi32>
    %11 = arith.select %7, %9, %10 : vector<8x1xi1>, vector<8x1xi32>
    %12 = vector.shape_cast %11 : vector<8x1xi32> to vector<8x1xi32>
    %13 = vector.broadcast %12 : vector<8x1xi32> to vector<8x32xi32>
    %14 = vector.extract_strided_slice %0 {offsets = [0, 1], sizes = [8, 1], strides = [1, 1]} : vector<8x4xi32> to vector<8x1xi32>
    %c0_i32_2 = arith.constant 0 : i32
    %15 = vector.broadcast %c0_i32_2 : i32 to vector<8x1xi32>
    %16 = arith.cmpi sge, %14, %15 : vector<8x1xi32>
    %c32_i32_3 = arith.constant 32 : i32
    %17 = vector.broadcast %c32_i32_3 : i32 to vector<8x1xi32>
    %18 = arith.cmpi slt, %14, %17 : vector<8x1xi32>
    %19 = arith.andi %16, %18 : vector<8x1xi1>
    %c32_i32_4 = arith.constant 32 : i32
    %20 = vector.broadcast %c32_i32_4 : i32 to vector<8x1xi32>
    %21 = arith.addi %14, %20 : vector<8x1xi32>
    %c-1_i32_5 = arith.constant -1 : i32
    %22 = vector.broadcast %c-1_i32_5 : i32 to vector<8x1xi32>
    %23 = arith.select %19, %21, %22 : vector<8x1xi1>, vector<8x1xi32>
    %24 = vector.shape_cast %23 : vector<8x1xi32> to vector<8x1xi32>
    %25 = vector.broadcast %24 : vector<8x1xi32> to vector<8x32xi32>
    %26 = vector.extract_strided_slice %0 {offsets = [0, 2], sizes = [8, 1], strides = [1, 1]} : vector<8x4xi32> to vector<8x1xi32>
    %c0_i32_6 = arith.constant 0 : i32
    %27 = vector.broadcast %c0_i32_6 : i32 to vector<8x1xi32>
    %28 = arith.cmpi sge, %26, %27 : vector<8x1xi32>
    %c32_i32_7 = arith.constant 32 : i32
    %29 = vector.broadcast %c32_i32_7 : i32 to vector<8x1xi32>
    %30 = arith.cmpi slt, %26, %29 : vector<8x1xi32>
    %31 = arith.andi %28, %30 : vector<8x1xi1>
    %c64_i32 = arith.constant 64 : i32
    %32 = vector.broadcast %c64_i32 : i32 to vector<8x1xi32>
    %33 = arith.addi %26, %32 : vector<8x1xi32>
    %c-1_i32_8 = arith.constant -1 : i32
    %34 = vector.broadcast %c-1_i32_8 : i32 to vector<8x1xi32>
    %35 = arith.select %31, %33, %34 : vector<8x1xi1>, vector<8x1xi32>
    %36 = vector.shape_cast %35 : vector<8x1xi32> to vector<8x1xi32>
    %37 = vector.broadcast %36 : vector<8x1xi32> to vector<8x32xi32>
    %38 = vector.extract_strided_slice %0 {offsets = [0, 3], sizes = [8, 1], strides = [1, 1]} : vector<8x4xi32> to vector<8x1xi32>
    %c0_i32_9 = arith.constant 0 : i32
    %39 = vector.broadcast %c0_i32_9 : i32 to vector<8x1xi32>
    %40 = arith.cmpi sge, %38, %39 : vector<8x1xi32>
    %c32_i32_10 = arith.constant 32 : i32
    %41 = vector.broadcast %c32_i32_10 : i32 to vector<8x1xi32>
    %42 = arith.cmpi slt, %38, %41 : vector<8x1xi32>
    %43 = arith.andi %40, %42 : vector<8x1xi1>
    %c96_i32 = arith.constant 96 : i32
    %44 = vector.broadcast %c96_i32 : i32 to vector<8x1xi32>
    %45 = arith.addi %38, %44 : vector<8x1xi32>
    %c-1_i32_11 = arith.constant -1 : i32
    %46 = vector.broadcast %c-1_i32_11 : i32 to vector<8x1xi32>
    %47 = arith.select %43, %45, %46 : vector<8x1xi1>, vector<8x1xi32>
    %48 = vector.shape_cast %47 : vector<8x1xi32> to vector<8x1xi32>
    %49 = vector.broadcast %48 : vector<8x1xi32> to vector<8x32xi32>
    %50 = tpu.concatenate %13, %25, %37, %49 in 1 : vector<8x32xi32>, vector<8x32xi32>, vector<8x32xi32>, vector<8x32xi32> -> vector<8x128xi32>
    %51 = arith.cmpi eq, %1, %50 : vector<8x128xi32>
    %52 = arith.extui %51 : vector<8x128xi1> to vector<8x128xi32>
    %53 = arith.sitofp %52 : vector<8x128xi32> to vector<8x128xf32>
    %c0_12 = arith.constant 0 : index
    %c0_13 = arith.constant 0 : index
    %54 = vector.load %arg2[%c0_12, %c0_13] : memref<128x128xf32, #tpu.memory_space<vmem>>, vector<128x128xf32>
    %cst = arith.constant dense<0.000000e+00> : vector<8x128xf32>
    %55 = tpu.matmul %53, %54, %cst {dimension_numbers = #tpu.dot_dimension_numbers<[1], [0], [0], [1], [0, 0, 1, 1], [], []>} : vector<8x128xf32>, vector<128x128xf32>, vector<8x128xf32> -> vector<8x128xf32>
    %c0_14 = arith.constant 0 : index
    %c0_15 = arith.constant 0 : index
    %56 = vector.load %arg3[%c0_14, %c0_15] : memref<8x128xf32, #tpu.memory_space<vmem>>, vector<8x128xf32>
    tpu.vector_store %arg3[%c0_14, %c0_15], %55 {strides = array<i32>} : memref<8x128xf32, #tpu.memory_space<vmem>>, vector<8x128xf32>,
    return
  }
  func.func @transform_0(%arg0: i32) -> (i32, i32) {
    %c0_i32 = arith.constant 0 : i32
    %c0_i32_0 = arith.constant 0 : i32
    return %arg0, %c0_i32 : i32, i32
  }
  func.func @transform_1(%arg0: i32) -> (i32, i32) {
    %c0_i32 = arith.constant 0 : i32
    %c0_i32_0 = arith.constant 0 : i32
    %c0_i32_1 = arith.constant 0 : i32
    return %c0_i32, %c0_i32_0 : i32, i32
  }
  func.func @transform_2(%arg0: i32) -> (i32, i32) {
    %c0_i32 = arith.constant 0 : i32
    %c0_i32_0 = arith.constant 0 : i32
    return %arg0, %c0_i32 : i32, i32
  }
}

</mosaic_0001>

<llo_original>
// kernel: tpu_custom_call.1
$region0: #{tpu_custom_call.1}
  #allocation0 [shape = 'u32[]', space=smem, size = 0x4, offset = 0x4, fixed_abs, tag = 'smem constant byte address 0x4 - core index']
  #allocation1 [shape = 'u32[144,128]{1,0:T(1,128)}', space=vmem, size = 0x12000, scoped, tag = 'internal scratch']
  %s0 = inlined_call_operand.vmem [shape: s32[8,4], index: 0, kind: input, shape index: {}]
  %s1 = inlined_call_operand.hbm [shape: f32[128,128], index: 1, kind: input, shape index: {}]
  %s2 = inlined_call_operand.hbm [shape: f32[8,128], index: 2, kind: output, shape index: {}]
  %s3 = sld [smem:[#allocation0]]
  $region22: #{tpu_custom_call.1} parent=0
    _
  %s5 = ssub.s32 1, %s3
  %s6 = scalar_select 0, %s5, %s3
  $region1: #{tpu_custom_call.1} parent=0
    #allocation2 [shape = 'u8[65536]{0}', space=vmem, size = 0x10000, scoped, tag = 'input window, operand 1, single buffered']
    #allocation3 [shape = 's32[1]{0}', space=sflag, size = 0x4, scoped, tag = 'scoped memory for tpu_custom_call.1']
    #allocation4 [shape = 's32[1]{0}', space=sflag, size = 0x4, scoped, tag = 'scoped memory for tpu_custom_call.1']
    #allocation5 [shape = 'u8[4096]{0}', space=vmem, size = 0x1000, scoped, tag = 'output window, operand 0, single buffered']
    %7 = vsyncpa [#allocation3], 0
    %8 = vsyncpa [#allocation4], 0
    // Predicated region
    $region2: #{tpu_custom_call.1} parent=1 // pred_check
      _
    $region3: #{tpu_custom_call.1} parent=1 // pred_check_branch
      %10 = sbr.rel (0) target = $region5
    $region4: #{tpu_custom_call.1} parent=1 // pred_region
      _
    $region5: #{tpu_custom_call.1} parent=1 // pred_fallthru
      _
    // Predicated region
    $region6: #{tpu_custom_call.1} parent=1 // pred_check
      _
    $region7: #{tpu_custom_call.1} parent=1 // pred_check_branch
      %12 = sbr.rel (0) target = $region9
    $region8: #{tpu_custom_call.1} parent=1 // pred_region
      %s14 = ssub.s32 2048, 2048
      %15 = vsyncadd [#allocation3], %s14
      %s16 = sshll.u32 [#allocation2], 4
      %s17 = int_to_ptr.vmem [resolvable:$true] %s16
      %22 = dma.hbm_to_vmem [thread:$0]  %s1, 2048, %s17, [#allocation3], 128, 128, 8
    $region9: #{tpu_custom_call.1} parent=1 // pred_fallthru
      _
    // Predicated region
    $region10: #{tpu_custom_call.1} parent=1 // pred_check
      _
    $region11: #{tpu_custom_call.1} parent=1 // pred_check_branch
      %24 = sbr.rel (0) target = $region13
    $region12: #{tpu_custom_call.1} parent=1 // pred_region
      %25 = dma.done [#allocation3], 2048
    $region13: #{tpu_custom_call.1} parent=1 // pred_fallthru
      _
    %v26 = vld [vmem:[%s0] sm:$0xff]
    %v27 = vlaneseq
    %v28 = vand.u32 %v27, 127
    %vm29 = vcmp.ge.s32.totalorder %v26, 0
    %vm30 = vcmp.lt.s32.totalorder %v26, 32
    %vm31 = vmand %vm29, %vm30
    %v32 = vsel %vm31, %v26, 4294967295
    %33 = vset.pattern.permute.xlu0 0
    %34 = vperm.xlu0 %33, %v32
    %v35 = vpop.permute.xlu0 %34
    %v36 = vadd.s32 %v26, 32
    %v37 = vsel %vm31, %v36, 4294967295
    %38 = vset.pattern.permute.xlu0 1
    %39 = vperm.xlu0 %38, %v37
    %v40 = vpop.permute.xlu0 %39
    %v41 = vadd.s32 %v26, 64
    %v42 = vsel %vm31, %v41, 4294967295
    %43 = vset.pattern.permute.xlu0 2
    %44 = vperm.xlu0 %43, %v42
    %v45 = vpop.permute.xlu0 %44
    %v46 = vadd.s32 %v26, 96
    %v47 = vsel %vm31, %v46, 4294967295
    %48 = vset.pattern.permute.xlu0 3
    %49 = vperm.xlu0 %48, %v47
    %v50 = vpop.permute.xlu0 %49
    %vm51 = vcmask 261120
    %v52 = vsel %vm51, %v35, %v40
    %vm53 = vcmask 523264
    %v54 = vsel %vm53, %v52, %v45
    %vm55 = vcmask 785408
    %v56 = vsel %vm55, %v54, %v50
    %vm57 = vcmp.eq.s32.totalorder %v28, %v56
    %v58 = vsel %vm57, 1, 0
    %v59 = vcvt.s32.f32 %v58
    %v60 = vld [vmem:[#allocation2] sm:$0xff]
    %v61 = vld [vmem:[#allocation2 + $0x8] sm:$0xff]
    %v62 = vld [vmem:[#allocation2 + $0x10] sm:$0xff]
    %v63 = vld [vmem:[#allocation2 + $0x18] sm:$0xff]
    %v64 = vld [vmem:[#allocation2 + $0x20] sm:$0xff]
    %v65 = vld [vmem:[#allocation2 + $0x28] sm:$0xff]
    %v66 = vld [vmem:[#allocation2 + $0x30] sm:$0xff]
    %v67 = vld [vmem:[#allocation2 + $0x38] sm:$0xff]
    %v68 = vld [vmem:[#allocation2 + $0x40] sm:$0xff]
    %v69 = vld [vmem:[#allocation2 + $0x48] sm:$0xff]
    %v70 = vld [vmem:[#allocation2 + $0x50] sm:$0xff]
    %v71 = vld [vmem:[#allocation2 + $0x58] sm:$0xff]
    %v72 = vld [vmem:[#allocation2 + $0x60] sm:$0xff]
    %v73 = vld [vmem:[#allocation2 + $0x68] sm:$0xff]
    %v74 = vld [vmem:[#allocation2 + $0x70] sm:$0xff]
    %v75 = vld [vmem:[#allocation2 + $0x78] sm:$0xff]
    %76 = vmatprep.subr.mxu0 0.0
    %77 = vmatpush1.msra.mxu0 %v60
    %78 = vmatprep.subr.mxu0 0.0
    %79 = vmatpush1.msra.mxu0 %v61
    %80 = vmatprep.subr.mxu0 0.0
    %81 = vmatpush1.msra.mxu0 %v62
    %82 = vmatprep.subr.mxu0 0.0
    %83 = vmatpush1.msra.mxu0 %v63
    %84 = vmatprep.subr.mxu0 0.0
    %85 = vmatpush1.msra.mxu0 %v64
    %86 = vmatprep.subr.mxu0 0.0
    %87 = vmatpush1.msra.mxu0 %v65
    %88 = vmatprep.subr.mxu0 0.0
    %89 = vmatpush1.msra.mxu0 %v66
    %90 = vmatprep.subr.mxu0 0.0
    %91 = vmatpush1.msra.mxu0 %v67
    %92 = vmatprep.subr.mxu0 0.0
    %93 = vmatpush1.msra.mxu0 %v68
    %94 = vmatprep.subr.mxu0 0.0
    %95 = vmatpush1.msra.mxu0 %v69
    %96 = vmatprep.subr.mxu0 0.0
    %97 = vmatpush1.msra.mxu0 %v70
    %98 = vmatprep.subr.mxu0 0.0
    %99 = vmatpush1.msra.mxu0 %v71
    %100 = vmatprep.subr.mxu0 0.0
    %101 = vmatpush1.msra.mxu0 %v72
    %102 = vmatprep.subr.mxu0 0.0
    %103 = vmatpush1.msra.mxu0 %v73
    %104 = vmatprep.subr.mxu0 0.0
    %105 = vmatpush1.msra.mxu0 %v74
    %106 = vmatprep.subr.mxu0 0.0
    %107 = vmatpush1.msra.mxu0 %v75
    %108 = vmatprep.subr.mxu0 0.0
    %109 = vmatpush1.msra.mxu0 0.0
    %110 = vmatprep.subr.mxu0 0.0
    %111 = vmatpush1.msra.mxu0 0.0
    %112 = vmatprep.subr.mxu0 0.0
    %113 = vmatpush1.msra.mxu0 0.0
    %114 = vmatprep.subr.mxu0 0.0
    %115 = vmatpush1.msra.mxu0 0.0
    %116 = vmatprep.subr.mxu0 0.0
    %117 = vmatpush1.msra.mxu0 0.0
    %118 = vmatprep.subr.mxu0 0.0
    %119 = vmatpush1.msra.mxu0 0.0
    %120 = vmatprep.subr.mxu0 0.0
    %121 = vmatpush1.msra.mxu0 0.0
    %122 = vmatprep.subr.mxu0 0.0
    %123 = vmatpush1.msra.mxu0 0.0
    %124 = vmatprep.subr.mxu0 0.0
    %125 = vmatpush1.msra.mxu0 0.0
    %126 = vmatprep.subr.mxu0 0.0
    %127 = vmatpush1.msra.mxu0 0.0
    %128 = vmatprep.subr.mxu0 0.0
    %129 = vmatpush1.msra.mxu0 0.0
    %130 = vmatprep.subr.mxu0 0.0
    %131 = vmatpush1.msra.mxu0 0.0
    %132 = vmatprep.subr.mxu0 0.0
    %133 = vmatpush1.msra.mxu0 0.0
    %134 = vmatprep.subr.mxu0 0.0
    %135 = vmatpush1.msra.mxu0 0.0
    %136 = vmatprep.subr.mxu0 0.0
    %137 = vmatpush1.msra.mxu0 0.0
    %138 = vmatprep.subr.mxu0 0.0
    %139 = vmatpush1.msra.mxu0 0.0
    %140 = vmatprep.mubr.f32.mxu0 0.0
    %141 = vmatmul.mubr.f32.gmra.mrb[0].mxu0 %v59
    %v142 = vpop.f32.mrb[0].mxu0
    %v143 = vadd.f32 0.0, %v142
    %v144 = vpop.f32.mrb[0].mxu0
    %145 = vdwg.mxu0
    %146 = vst [vmem:[#allocation5] sm:$0xff] %v143
    // Predicated region
    $region14: #{tpu_custom_call.1} parent=1 // pred_check
      _
    $region15: #{tpu_custom_call.1} parent=1 // pred_check_branch
      %148 = sbr.rel (0) target = $region17
    $region16: #{tpu_custom_call.1} parent=1 // pred_region
      %s150 = ssub.s32 128, 128
      %151 = vsyncadd [#allocation4], %s150
      %s153 = sshll.u32 [#allocation5], 4
      %s154 = int_to_ptr.vmem [resolvable:$true] %s153
      %156 = dma.vmem_to_hbm [thread:$0]  %s154, 128, %s2, [#allocation4]
    $region17: #{tpu_custom_call.1} parent=1 // pred_fallthru
      _
    // Predicated region
    $region18: #{tpu_custom_call.1} parent=1 // pred_check
      _
    $region19: #{tpu_custom_call.1} parent=1 // pred_check_branch
      %158 = sbr.rel (0) target = $region21
    $region20: #{tpu_custom_call.1} parent=1 // pred_region
      %159 = dma.done [#allocation4], 128
    $region21: #{tpu_custom_call.1} parent=1 // pred_fallthru
      _
    %160 = vsyncpa [#allocation3], 1
    %161 = vsyncpa [#allocation4], 1

</llo_original>
